<compile_context>
chip_gen: v6e
topology: v6e:2x2x1
jax: 0.10.0
libtpu: 0.0.40
codegen_flags: <defaults>
</compile_context>

<pallas_src>
import functools

import jax
import jax.numpy as jnp
from jax import lax
from jax.experimental import pallas as pl
from jax.experimental.pallas import tpu as pltpu

_VMEM_LIMIT = 32 * 1024 * 1024   # safe headroom on v5e/v6e (128 MiB) and v7x (64 MiB)


# ---------------------------------------------------------------------------
# small helpers
# ---------------------------------------------------------------------------
def _round_up(n, m):
    return ((n + m - 1) // m) * m


def _pad_axis(a, axis, size):
    if a.shape[axis] == size:
        return a
    pads = [(0, 0)] * a.ndim
    pads[axis] = (0, size - a.shape[axis])
    return jnp.pad(a, pads)


def _largest_divisor_le(n, cap):
    for d in range(min(n, cap), 0, -1):
        if n % d == 0:
            return d
    return 1


def _pick_tile(dim, preferred):
    for t in preferred:
        if dim % t == 0:
            return t
    return dim


# ---------------------------------------------------------------------------
# Kernel 1: tiled matmul + BN(scale/bias) + optional ReLU   (for the 1x1 convs)
#   grid = (M tiles, N tiles, K tiles), f32 VMEM accumulator, epilogue at k==last
# ---------------------------------------------------------------------------
def _matmul_bn_act_kernel(x_ref, w_ref, s_ref, b_ref, o_ref, acc_ref, *, relu):
    @pl.when(pl.program_id(2) == 0)
    def _init():
        acc_ref[...] = jnp.zeros_like(acc_ref)

    acc_ref[...] += jnp.dot(x_ref[...], w_ref[...],
                            preferred_element_type=jnp.float32)

    @pl.when(pl.program_id(2) == pl.num_programs(2) - 1)
    def _finalize():
        y = acc_ref[...] * s_ref[...] + b_ref[...]
        if relu:
            y = jnp.maximum(y, 0.0)
        o_ref[...] = y.astype(o_ref.dtype)


def matmul_bn_act(x, w, scale, bias, *, relu, out_dtype):
    """x: (M,K) bf16, w: (K,N) bf16, scale/bias: (N,) f32 -> (M,N) out_dtype."""
    M, K = x.shape
    K2, Np = w.shape
    assert K == K2

    tn = _pick_tile(Np, (256, 128))
    tk = _pick_tile(K, (512, 256, 128))
    tm = min(256, _round_up(M, 8))
    Mp = _round_up(M, tm)
    xp = x if Mp == M else jnp.pad(x, ((0, Mp - M), (0, 0)))

    grid = (Mp // tm, Np // tn, K // tk)
    kern = functools.partial(_matmul_bn_act_kernel, relu=relu)
    out = pl.pallas_call(
        kern,
        out_shape=jax.ShapeDtypeStruct((Mp, Np), out_dtype),
        grid=grid,
        in_specs=[
            pl.BlockSpec((tm, tk), lambda i, j, kk: (i, kk)),
            pl.BlockSpec((tk, tn), lambda i, j, kk: (kk, j)),
            pl.BlockSpec((1, tn), lambda i, j, kk: (0, j)),
            pl.BlockSpec((1, tn), lambda i, j, kk: (0, j)),
        ],
        out_specs=pl.BlockSpec((tm, tn), lambda i, j, kk: (i, j)),
        scratch_shapes=[pltpu.VMEM((tm, tn), jnp.float32)],
        compiler_params=pltpu.CompilerParams(
            dimension_semantics=("parallel", "parallel", "arbitrary"),
            vmem_limit_bytes=_VMEM_LIMIT),
        cost_estimate=pl.CostEstimate(
            flops=2 * Mp * Np * K,
            transcendentals=0,
            bytes_accessed=(xp.size * xp.dtype.itemsize
                            + w.size * w.dtype.itemsize
                            + Mp * Np * jnp.dtype(out_dtype).itemsize)),
    )(xp, w, scale.reshape(1, -1), bias.reshape(1, -1))
    return out if Mp == M else out[:M]


# ---------------------------------------------------------------------------
# Kernel 2: separable spatial conv (k taps along axis 1 of the block) + BN + ReLU.
# The k-tap reduction is done in-kernel as k shifted matmuls (no im2col blow-up).
# Works for both layouts:
#   width conv : x block (tr, Wpad, Cin)      -> out (tr, Wout, tn)
#   height conv: x block (1, Hpad, W, Cin)    -> out (1, Hout, W, tn)
# ---------------------------------------------------------------------------
def _sep_conv_bn_act_kernel(x_ref, w_ref, s_ref, b_ref, o_ref, *, k, relu):
    o_shape = o_ref.shape
    out_len = o_shape[1]
    tn = o_shape[-1]
    cin = x_ref.shape[-1]
    m = 1
    for d in o_shape[:-1]:
        m *= d

    if len(o_shape) == 3:
        # Conv axis is the sublane dim: unpack bf16 -> f32 once so the shifted
        # (sublane-offset) slices below are plain 32-bit sublane slices.
        xfull = x_ref[...].astype(jnp.float32)
    else:
        # Conv axis is a vreg-granular (non sublane/lane) dim: slice bf16 directly.
        xfull = x_ref[...]

    acc = jnp.zeros((m, tn), jnp.float32)
    for j in range(k):
        if xfull.ndim == 3:
            xj = xfull[:, j:j + out_len, :]
        else:
            xj = xfull[:, j:j + out_len, :, :]
        xj = xj.reshape(m, cin).astype(w_ref.dtype)   # lossless back to bf16 for the MXU
        acc = acc + jnp.dot(xj, w_ref[j], preferred_element_type=jnp.float32)

    y = acc * s_ref[...] + b_ref[...]
    if relu:
        y = jnp.maximum(y, 0.0)
    o_ref[...] = y.reshape(o_shape).astype(o_ref.dtype)


def sep_conv_w_bn_act(x3, w, scale, bias, *, k, relu, out_dtype):
    """(1,k) conv, stride 1. x3: (R, Wpad, Cin) bf16, w: (k, Cin, N) bf16."""
    R, Wpad, Cin = x3.shape
    Np = w.shape[-1]
    Wout = Wpad - k + 1
    tn = 128 if Np % 128 == 0 else Np
    tr = _largest_divisor_le(R, 8)
    kern = functools.partial(_sep_conv_bn_act_kernel, k=k, relu=relu)
    return pl.pallas_call(
        kern,
        out_shape=jax.ShapeDtypeStruct((R, Wout, Np), out_dtype),
        grid=(R // tr, Np // tn),
        in_specs=[
            pl.BlockSpec((tr, Wpad, Cin), lambda r, n: (r, 0, 0)),
            pl.BlockSpec((k, Cin, tn), lambda r, n: (0, 0, n)),
            pl.BlockSpec((1, tn), lambda r, n: (0, n)),
            pl.BlockSpec((1, tn), lambda r, n: (0, n)),
        ],
        out_specs=pl.BlockSpec((tr, Wout, tn), lambda r, n: (r, 0, n)),
        compiler_params=pltpu.CompilerParams(
            dimension_semantics=("parallel", "parallel"),
            vmem_limit_bytes=_VMEM_LIMIT),
        cost_estimate=pl.CostEstimate(
            flops=2 * R * Wout * Cin * Np * k,
            transcendentals=0,
            bytes_accessed=(x3.size * x3.dtype.itemsize + w.size * w.dtype.itemsize
                            + R * Wout * Np * jnp.dtype(out_dtype).itemsize)),
    )(x3, w, scale.reshape(1, -1), bias.reshape(1, -1))


def sep_conv_h_bn_act(x4, w, scale, bias, *, k, relu, out_dtype):
    """(k,1) conv, stride 1. x4: (N, Hpad, W, Cin) bf16, w: (k, Cin, Nc) bf16."""
    Nb, Hpad, Wd, Cin = x4.shape
    Np = w.shape[-1]
    Hout = Hpad - k + 1
    tn = 128 if Np % 128 == 0 else Np
    kern = functools.partial(_sep_conv_bn_act_kernel, k=k, relu=relu)
    return pl.pallas_call(
        kern,
        out_shape=jax.ShapeDtypeStruct((Nb, Hout, Wd, Np), out_dtype),
        grid=(Nb, Np // tn),
        in_specs=[
            pl.BlockSpec((1, Hpad, Wd, Cin), lambda b, n: (b, 0, 0, 0)),
            pl.BlockSpec((k, Cin, tn), lambda b, n: (0, 0, n)),
            pl.BlockSpec((1, tn), lambda b, n: (0, n)),
            pl.BlockSpec((1, tn), lambda b, n: (0, n)),
        ],
        out_specs=pl.BlockSpec((1, Hout, Wd, tn), lambda b, n: (b, 0, 0, n)),
        compiler_params=pltpu.CompilerParams(
            dimension_semantics=("parallel", "parallel"),
            vmem_limit_bytes=_VMEM_LIMIT),
        cost_estimate=pl.CostEstimate(
            flops=2 * Nb * Hout * Wd * Cin * Np * k,
            transcendentals=0,
            bytes_accessed=(x4.size * x4.dtype.itemsize + w.size * w.dtype.itemsize
                            + Nb * Hout * Wd * Np * jnp.dtype(out_dtype).itemsize)),
    )(x4, w, scale.reshape(1, -1), bias.reshape(1, -1))


# ---------------------------------------------------------------------------
# Parameter init (deterministic, synthetic) — mirrors Rec.__init__ shapes (PyTorch layout)
# ---------------------------------------------------------------------------
def init_rec_params(key, inplanes, outplanes, k=3, t=6, eps=1e-5):
    mid = inplanes * t
    keys = jax.random.split(key, 8)

    def bn_params(kk, c):
        gamma = 1.0 + 0.1 * jax.random.normal(jax.random.fold_in(kk, 0), (c,))
        beta = 0.1 * jax.random.normal(jax.random.fold_in(kk, 1), (c,))
        mean = 0.1 * jax.random.normal(jax.random.fold_in(kk, 2), (c,))
        var = 1.0 + 0.5 * jnp.abs(jax.random.normal(jax.random.fold_in(kk, 3), (c,)))
        scale = gamma / jnp.sqrt(var + eps)
        bias = beta - mean * scale
        return scale.astype(jnp.float32), bias.astype(jnp.float32)

    return {
        "w1": 0.1 * jax.random.normal(keys[0], (mid, inplanes, 1, 1), jnp.float32),
        "bn1": bn_params(keys[1], mid),
        "w2_1": 0.1 * jax.random.normal(keys[2], (mid, mid, 1, k), jnp.float32),
        "bn2_1": bn_params(keys[3], mid),
        "w2_2": 0.1 * jax.random.normal(keys[4], (mid, mid, k, 1), jnp.float32),
        "bn2_2": bn_params(keys[5], mid),
        "w3": 0.1 * jax.random.normal(keys[6], (outplanes, mid, 1, 1), jnp.float32),
        "bn3": bn_params(keys[7], outplanes),
    }


# ---------------------------------------------------------------------------
# Pack params for the kernels: transpose, zero-pad channels to 128, cast to bf16
# ---------------------------------------------------------------------------
def pack_rec_params(params):
    mid, cin = params["w1"].shape[0], params["w1"].shape[1]
    cout = params["w3"].shape[0]
    midp = _round_up(mid, 128)
    coutp = _round_up(cout, 128)

    def padded_bn(sb, n):
        s, b = sb
        return (_pad_axis(s, 0, n).astype(jnp.float32),
                _pad_axis(b, 0, n).astype(jnp.float32))

    w1 = _pad_axis(params["w1"][:, :, 0, 0].T, 1, midp).astype(jnp.bfloat16)          # (cin, midp)
    w21 = jnp.transpose(params["w2_1"][:, :, 0, :], (2, 1, 0))                         # (k, mid, mid)
    w21 = _pad_axis(_pad_axis(w21, 1, midp), 2, midp).astype(jnp.bfloat16)
    w22 = jnp.transpose(params["w2_2"][:, :, :, 0], (2, 1, 0))                         # (k, mid, mid)
    w22 = _pad_axis(_pad_axis(w22, 1, midp), 2, midp).astype(jnp.bfloat16)
    w3 = _pad_axis(_pad_axis(params["w3"][:, :, 0, 0].T, 0, midp), 1, coutp).astype(jnp.bfloat16)

    return {
        "w1": w1, "bn1": padded_bn(params["bn1"], midp),
        "w21": w21, "bn21": padded_bn(params["bn2_1"], midp),
        "w22": w22, "bn22": padded_bn(params["bn2_2"], midp),
        "w3": w3, "bn3": padded_bn(params["bn3"], coutp),
        "cin": cin, "mid": mid, "midp": midp, "cout": cout, "coutp": coutp,
    }


# ---------------------------------------------------------------------------
# Rec forward (Pallas-backed)
# ---------------------------------------------------------------------------
def rec_forward(x_nchw, packed, *, stride=1, k=3):
    pad = k // 2
    x = jnp.transpose(x_nchw, (0, 2, 3, 1)).astype(jnp.bfloat16)   # NCHW -> NHWC, bf16
    N, H, W, Cin = x.shape
    midp, coutp, cout = packed["midp"], packed["coutp"], packed["cout"]

    # conv1 (1x1) + bn1 + relu
    s, b = packed["bn1"]
    y = matmul_bn_act(x.reshape(-1, Cin), packed["w1"], s, b,
                      relu=True, out_dtype=jnp.bfloat16).reshape(N, H, W, midp)

    # conv2_1 (1,k) + bn2_1 + relu  (k fused shifted matmuls; no im2col)
    s, b = packed["bn21"]
    yp = jnp.pad(y, ((0, 0), (0, 0), (pad, pad), (0, 0)))
    y = sep_conv_w_bn_act(yp.reshape(N * H, W + 2 * pad, midp), packed["w21"], s, b,
                          k=k, relu=True, out_dtype=jnp.bfloat16)
    wfull = W + 2 * pad - k + 1
    wout = (W + 2 * pad - k) // stride + 1
    y = y.reshape(N, H, wfull, midp)
    if stride > 1:
        # TODO(synk): strided in-kernel slices instead of compute-then-subsample.
        y = y[:, :, ::stride, :][:, :, :wout, :]

    # conv2_2 (k,1) + bn2_2 + relu
    s, b = packed["bn22"]
    yp = jnp.pad(y, ((0, 0), (pad, pad), (0, 0), (0, 0)))
    y = sep_conv_h_bn_act(yp, packed["w22"], s, b, k=k, relu=True, out_dtype=jnp.bfloat16)
    hout = (H + 2 * pad - k) // stride + 1
    if stride > 1:
        y = y[:, ::stride, :, :][:, :hout, :, :]

    # conv3 (1x1) + bn3 (no relu)
    s, b = packed["bn3"]
    out = matmul_bn_act(y.reshape(-1, midp), packed["w3"], s, b,
                        relu=False, out_dtype=jnp.float32)
    out = out.reshape(N, hout, wout, coutp)[..., :cout]
    return jnp.transpose(out, (0, 3, 1, 2))                          # NHWC -> NCHW


# ---------------------------------------------------------------------------
# Pure-JAX (lax.conv, f32) reference for verification
# ---------------------------------------------------------------------------
def rec_forward_ref(x_nchw, params, *, stride=1, k=3):
    pad = k // 2

    def conv(x, w, strides, padding):
        return lax.conv_general_dilated(
            x, w, window_strides=strides, padding=padding,
            dimension_numbers=("NCHW", "OIHW", "NCHW"))

    def bn_act(x, sb, relu):
        s, b = sb
        y = x * s[None, :, None, None] + b[None, :, None, None]
        return jnp.maximum(y, 0.0) if relu else y

    x = x_nchw.astype(jnp.float32)
    y = bn_act(conv(x, params["w1"], (1, 1), "VALID"), params["bn1"], True)
    y = bn_act(conv(y, params["w2_1"], (1, stride), [(0, 0), (pad, pad)]), params["bn2_1"], True)
    y = bn_act(conv(y, params["w2_2"], (stride, 1), [(pad, pad), (0, 0)]), params["bn2_2"], True)
    y = bn_act(conv(y, params["w3"], (1, 1), "VALID"), params["bn3"], False)
    return y


if __name__ == "__main__":
    key = jax.random.PRNGKey(0)
    kx, kp = jax.random.split(key)

    batch, inplanes, outplanes, spatial = 2, 4, 8, 16
    stride, k, t = 1, 3, 6

    x = jax.random.normal(kx, (batch, inplanes, spatial, spatial), jnp.float32)
    params = init_rec_params(kp, inplanes, outplanes, k=k, t=t)
    packed = pack_rec_params(params)

    out = jax.block_until_ready(rec_forward(x, packed, stride=stride, k=k))
    ref = jax.block_until_ready(rec_forward_ref(x, params, stride=stride, k=k))

    assert out.shape == ref.shape == (batch, outplanes, spatial, spatial), out.shape
    max_err = float(jnp.max(jnp.abs(out - ref)))
    # bf16 operands with f32 accumulation -> loosened tolerance vs the f32 reference.
    assert jnp.allclose(out, ref, atol=3e-2, rtol=3e-2), max_err

    print("KERNEL_OK")
</pallas_src>

<mosaic_0001>
module attributes {stable_mosaic.version = 11 : i64} {
  func.func @_matmul_bn_act_kernel(%arg0: i32, %arg1: i32, %arg2: i32, %arg3: memref<256x4xbf16, #tpu.memory_space<vmem>>, %arg4: memref<4x128xbf16, #tpu.memory_space<vmem>>, %arg5: memref<1x128xf32, #tpu.memory_space<vmem>>, %arg6: memref<1x128xf32, #tpu.memory_space<vmem>>, %arg7: memref<256x128xbf16, #tpu.memory_space<vmem>>, %arg8: memref<256x128xf32, #tpu.memory_space<vmem>>) attributes {dimension_semantics = [#tpu.dimension_semantics<parallel>, #tpu.dimension_semantics<parallel>, #tpu.dimension_semantics<arbitrary>], iteration_bounds = array<i64: 2, 1, 1>, scalar_prefetch = 0 : i64, scratch_operands = 1 : i64, tpu.core_type = #tpu.core_type<tc>, window_params = [{transform_indices = @transform_0, window_bounds = array<i64: 256, 4>}, {transform_indices = @transform_1, window_bounds = array<i64: 4, 128>}, {transform_indices = @transform_2, window_bounds = array<i64: 1, 128>}, {transform_indices = @transform_3, window_bounds = array<i64: 1, 128>}, {transform_indices = @transform_4, window_bounds = array<i64: 256, 128>}]} {
    %c0_i32 = arith.constant 0 : i32
    %0 = arith.cmpi eq, %arg2, %c0_i32 : i32
    %1 = arith.extui %0 : i1 to i32
    %c0_i32_0 = arith.constant 0 : i32
    %2 = arith.cmpi ne, %1, %c0_i32_0 : i32
    scf.if %2 {
      %cst_10 = arith.constant 0.000000e+00 : f32
      %12 = vector.broadcast %cst_10 : f32 to vector<256x128xf32>
      %c0_11 = arith.constant 0 : index
      %c0_12 = arith.constant 0 : index
      %13 = vector.load %arg8[%c0_11, %c0_12] : memref<256x128xf32, #tpu.memory_space<vmem>>, vector<256x128xf32>
      tpu.vector_store %arg8[%c0_11, %c0_12], %12 {strides = array<i32>} : memref<256x128xf32, #tpu.memory_space<vmem>>, vector<256x128xf32>,
    } else {
    }
    %c0 = arith.constant 0 : index
    %c0_1 = arith.constant 0 : index
    %3 = vector.load %arg8[%c0, %c0_1] : memref<256x128xf32, #tpu.memory_space<vmem>>, vector<256x128xf32>
    %c0_2 = arith.constant 0 : index
    %c0_3 = arith.constant 0 : index
    %4 = vector.load %arg3[%c0_2, %c0_3] : memref<256x4xbf16, #tpu.memory_space<vmem>>, vector<256x4xbf16>
    %c0_4 = arith.constant 0 : index
    %c0_5 = arith.constant 0 : index
    %5 = vector.load %arg4[%c0_4, %c0_5] : memref<4x128xbf16, #tpu.memory_space<vmem>>, vector<4x128xbf16>
    %cst = arith.constant dense<0.000000e+00> : vector<256x128xf32>
    %6 = tpu.matmul %4, %5, %cst {dimension_numbers = #tpu.dot_dimension_numbers<[1], [0], [0], [1], [0, 0, 1, 1], [], []>} : vector<256x4xbf16>, vector<4x128xbf16>, vector<256x128xf32> -> vector<256x128xf32>
    %7 = arith.addf %3, %6 : vector<256x128xf32>
    %c0_6 = arith.constant 0 : index
    %c0_7 = arith.constant 0 : index
    %8 = vector.load %arg8[%c0_6, %c0_7] : memref<256x128xf32, #tpu.memory_space<vmem>>, vector<256x128xf32>
    tpu.vector_store %arg8[%c0_6, %c0_7], %7 {strides = array<i32>} : memref<256x128xf32, #tpu.memory_space<vmem>>, vector<256x128xf32>,
    %c0_i32_8 = arith.constant 0 : i32
    %9 = arith.cmpi eq, %arg2, %c0_i32_8 : i32
    %10 = arith.extui %9 : i1 to i32
    %c0_i32_9 = arith.constant 0 : i32
    %11 = arith.cmpi ne, %10, %c0_i32_9 : i32
    scf.if %11 {
      %c0_10 = arith.constant 0 : index
      %c0_11 = arith.constant 0 : index
      %12 = vector.load %arg8[%c0_10, %c0_11] : memref<256x128xf32, #tpu.memory_space<vmem>>, vector<256x128xf32>
      %c0_12 = arith.constant 0 : index
      %c0_13 = arith.constant 0 : index
      %13 = vector.load %arg5[%c0_12, %c0_13] : memref<1x128xf32, #tpu.memory_space<vmem>>, vector<1x128xf32>
      %14 = vector.broadcast %13 : vector<1x128xf32> to vector<256x128xf32>
      %15 = arith.mulf %12, %14 : vector<256x128xf32>
      %c0_14 = arith.constant 0 : index
      %c0_15 = arith.constant 0 : index
      %16 = vector.load %arg6[%c0_14, %c0_15] : memref<1x128xf32, #tpu.memory_space<vmem>>, vector<1x128xf32>
      %17 = vector.broadcast %16 : vector<1x128xf32> to vector<256x128xf32>
      %18 = arith.addf %15, %17 : vector<256x128xf32>
      %cst_16 = arith.constant 0.000000e+00 : f32
      %19 = vector.broadcast %cst_16 : f32 to vector<256x128xf32>
      %20 = arith.maximumf %18, %19 : vector<256x128xf32>
      %21 = arith.truncf %20 : vector<256x128xf32> to vector<256x128xbf16>
      %c0_17 = arith.constant 0 : index
      %c0_18 = arith.constant 0 : index
      %22 = vector.load %arg7[%c0_17, %c0_18] : memref<256x128xbf16, #tpu.memory_space<vmem>>, vector<256x128xbf16>
      tpu.vector_store %arg7[%c0_17, %c0_18], %21 {strides = array<i32>} : memref<256x128xbf16, #tpu.memory_space<vmem>>, vector<256x128xbf16>,
    } else {
    }
    return
  }
  func.func @transform_0(%arg0: i32, %arg1: i32, %arg2: i32) -> (i32, i32) {
    %c0_i32 = arith.constant 0 : i32
    return %arg0, %arg2 : i32, i32
  }
  func.func @transform_1(%arg0: i32, %arg1: i32, %arg2: i32) -> (i32, i32) {
    %c0_i32 = arith.constant 0 : i32
    return %arg2, %arg1 : i32, i32
  }
  func.func @transform_2(%arg0: i32, %arg1: i32, %arg2: i32) -> (i32, i32) {
    %c0_i32 = arith.constant 0 : i32
    %c0_i32_0 = arith.constant 0 : i32
    return %c0_i32, %arg1 : i32, i32
  }
  func.func @transform_3(%arg0: i32, %arg1: i32, %arg2: i32) -> (i32, i32) {
    %c0_i32 = arith.constant 0 : i32
    %c0_i32_0 = arith.constant 0 : i32
    return %c0_i32, %arg1 : i32, i32
  }
  func.func @transform_4(%arg0: i32, %arg1: i32, %arg2: i32) -> (i32, i32) {
    %c0_i32 = arith.constant 0 : i32
    return %arg0, %arg1 : i32, i32
  }
}

</mosaic_0001>

<llo_original>
// kernel: tpu_custom_call.1
$region0: #{tpu_custom_call.1}
  #allocation0 [shape = 'u32[]', space=smem, size = 0x4, offset = 0x4, fixed_abs, tag = 'smem constant byte address 0x4 - core index']
  #allocation1 [shape = 'u32[144,128]{1,0:T(1,128)}', space=vmem, size = 0x12000, scoped, tag = 'internal scratch']
  #allocation2 [shape = 'f32[256,128]{1,0:T(8,128)}', space=vmem, size = 0x20000, scoped, tag = 'scratch operand']
  %s0 = inlined_call_operand.vmem [shape: bf16[512,4], index: 0, kind: input, shape index: {}]
  %s1 = inlined_call_operand.vmem [shape: bf16[4,128], index: 1, kind: input, shape index: {}]
  %s2 = inlined_call_operand.vmem [shape: f32[1,128], index: 2, kind: input, shape index: {}]
  %s3 = inlined_call_operand.vmem [shape: f32[1,128], index: 3, kind: input, shape index: {}]
  %s4 = inlined_call_operand.hbm [shape: bf16[512,128], index: 4, kind: output, shape index: {}]
  %s5 = sld [smem:[#allocation0]]
  $region57: #{tpu_custom_call.1} parent=0
    _
  %s7 = ssub.s32 1, %s5
  %s8 = scalar_select 0, %s7, %s5
  $region1: #{tpu_custom_call.1} parent=0
    #allocation3 [shape = 'u8[131072]{0}', space=vmem, size = 0x20000, scoped, tag = 'output window, operand 0']
    #allocation4 [shape = 's32[2]{0}', space=sflag, size = 0x8, scoped, tag = 'scoped memory for tpu_custom_call.1']
    %9 = vsyncpa [#allocation4], 0
    %s10 = scalar_lea.sflag [#allocation4], 1
    %11 = vsyncpa %s10, 0
    loop: start=0, step=1, limit=4
    $region2: #{tpu_custom_call.1} parent=1 // loop_pre_header
      _
    $region3: #{tpu_custom_call.1} parent=1 // loop_header
      %s13 = sphi 0, %s17
      %p14 = scmp.ge.s32.totalorder %s13, 4
      %s20 = sphi 0, %s39
      %s21 = sphi 0, %s35
      %s22 = sphi 0, %s31
      %s23 = sphi 0, %s20
      %s24 = sphi 0, %s21
      %s25 = sphi 0, %s22
      %s26 = sphi 0, %s23
      %s27 = sphi 0, %s24
      %s28 = sphi 0, %s25
      %s44 = sphi 0, %s46
      %s47 = sphi 0, %s44
      %s48 = sphi 0, %s47
      %s64 = sphi 0, %s48
      %s72 = sphi 0, %s74
      %s75 = sphi 0, %s72
      %s76 = sphi 0, %s75
      %s92 = sphi 0, %s76
      %s98 = sphi 0, %s100
      %s101 = sphi 0, %s98
      %s102 = sphi 0, %s101
      %s118 = sphi 0, %s102
      %s124 = sphi 0, %s126
      %s127 = sphi 0, %s124
      %s128 = sphi 0, %s127
      %s144 = sphi 0, %s128
      %s152 = sphi 0, %s154
      %s155 = sphi 0, %s152
      %s156 = sphi 0, %s155
      %s172 = sphi 0, %s156
    $region4: #{tpu_custom_call.1} parent=1 // loop_header_branch
      %16 = sbr.rel (%p14) target = $region8
    $region5: #{tpu_custom_call.1} parent=1 // loop_body
      %s18 = ssub.s32 %s13, 1
      %s19 = ssub.s32 %s13, 2
      %s29 = sadd.s32 1, %s22
      %p30 = scmp.ge.s32.totalorder %s29, 1
      %s31 = scalar_select %p30, 0, %s29
      %s32 = sadd.s32 1, %s21
      %s33 = scalar_select %p30, %s32, %s21
      %p34 = scmp.ge.s32.totalorder %s33, 1
      %s35 = scalar_select %p34, 0, %s33
      %s36 = sadd.s32 1, %s20
      %s37 = scalar_select %p34, %s36, %s20
      %p38 = scmp.ge.s32.totalorder %s37, 2
      %s39 = scalar_select %p38, 0, %s37
      %s40 = ssub.s32 %s20, %s39
      %s41 = ssub.s32 %s22, %s31
      %s42 = sor.u32 %s40, %s41
      %p43 = scmp.eq.s32.totalorder %s42, 0
      %s45 = sadd.s32 %s44, 1
      %s46 = scalar_select %p43, %s44, %s45
      %p49 = pneg %p43
      %p50 = scmp.eq.s32.totalorder %s13, 1
      %p51 = por %p49, %p50
      %p52 = scmp.ne.s32.totalorder %s44, %s47
      %p53 = scmp.eq.s32.totalorder %s13, 0
      %p54 = por %p52, %p53
      %p55 = scmp.ne.s32.totalorder %s44, %s47
      %p56 = scmp.eq.s32.totalorder %s18, 1
      %p57 = por %p55, %p56
      %p58 = scmp.ne.s32.totalorder %s47, %s48
      %p59 = scmp.eq.s32.totalorder %s18, 0
      %p60 = por %p58, %p59
      %p61 = scmp.ne.s32.totalorder %s47, %s48
      %p62 = scmp.eq.s32.totalorder %s19, 1
      %p63 = por %p61, %p62
      %p65 = scmp.ne.s32.totalorder %s48, %s64
      %p66 = scmp.eq.s32.totalorder %s19, 0
      %p67 = por %p65, %p66
      %s68 = ssub.s32 %s22, %s31
      %s69 = ssub.s32 %s21, %s35
      %s70 = sor.u32 %s68, %s69
      %p71 = scmp.eq.s32.totalorder %s70, 0
      %s73 = sadd.s32 %s72, 1
      %s74 = scalar_select %p71, %s72, %s73
      %p77 = pneg %p71
      %p78 = scmp.eq.s32.totalorder %s13, 1
      %p79 = por %p77, %p78
      %p80 = scmp.ne.s32.totalorder %s72, %s75
      %p81 = scmp.eq.s32.totalorder %s13, 0
      %p82 = por %p80, %p81
      %p83 = scmp.ne.s32.totalorder %s72, %s75
      %p84 = scmp.eq.s32.totalorder %s18, 1
      %p85 = por %p83, %p84
      %p86 = scmp.ne.s32.totalorder %s75, %s76
      %p87 = scmp.eq.s32.totalorder %s18, 0
      %p88 = por %p86, %p87
      %p89 = scmp.ne.s32.totalorder %s75, %s76
      %p90 = scmp.eq.s32.totalorder %s19, 1
      %p91 = por %p89, %p90
      %p93 = scmp.ne.s32.totalorder %s76, %s92
      %p94 = scmp.eq.s32.totalorder %s19, 0
      %p95 = por %p93, %p94
      %s96 = ssub.s32 %s21, %s35
      %p97 = scmp.eq.s32.totalorder %s96, 0
      %s99 = sadd.s32 %s98, 1
      %s100 = scalar_select %p97, %s98, %s99
      %p103 = pneg %p97
      %p104 = scmp.eq.s32.totalorder %s13, 1
      %p105 = por %p103, %p104
      %p106 = scmp.ne.s32.totalorder %s98, %s101
      %p107 = scmp.eq.s32.totalorder %s13, 0
      %p108 = por %p106, %p107
      %p109 = scmp.ne.s32.totalorder %s98, %s101
      %p110 = scmp.eq.s32.totalorder %s18, 1
      %p111 = por %p109, %p110
      %p112 = scmp.ne.s32.totalorder %s101, %s102
      %p113 = scmp.eq.s32.totalorder %s18, 0
      %p114 = por %p112, %p113
      %p115 = scmp.ne.s32.totalorder %s101, %s102
      %p116 = scmp.eq.s32.totalorder %s19, 1
      %p117 = por %p115, %p116
      %p119 = scmp.ne.s32.totalorder %s102, %s118
      %p120 = scmp.eq.s32.totalorder %s19, 0
      %p121 = por %p119, %p120
      %s122 = ssub.s32 %s21, %s35
      %p123 = scmp.eq.s32.totalorder %s122, 0
      %s125 = sadd.s32 %s124, 1
      %s126 = scalar_select %p123, %s124, %s125
      %p129 = pneg %p123
      %p130 = scmp.eq.s32.totalorder %s13, 1
      %p131 = por %p129, %p130
      %p132 = scmp.ne.s32.totalorder %s124, %s127
      %p133 = scmp.eq.s32.totalorder %s13, 0
      %p134 = por %p132, %p133
      %p135 = scmp.ne.s32.totalorder %s124, %s127
      %p136 = scmp.eq.s32.totalorder %s18, 1
      %p137 = por %p135, %p136
      %p138 = scmp.ne.s32.totalorder %s127, %s128
      %p139 = scmp.eq.s32.totalorder %s18, 0
      %p140 = por %p138, %p139
      %p141 = scmp.ne.s32.totalorder %s127, %s128
      %p142 = scmp.eq.s32.totalorder %s19, 1
      %p143 = por %p141, %p142
      %p145 = scmp.ne.s32.totalorder %s128, %s144
      %p146 = scmp.eq.s32.totalorder %s19, 0
      %p147 = por %p145, %p146
      %s148 = ssub.s32 %s20, %s39
      %s149 = ssub.s32 %s21, %s35
      %s150 = sor.u32 %s148, %s149
      %p151 = scmp.eq.s32.totalorder %s150, 0
      %s153 = sadd.s32 %s152, 1
      %s154 = scalar_select %p151, %s152, %s153
      %p157 = pneg %p151
      %p158 = scmp.eq.s32.totalorder %s13, 1
      %p159 = por %p157, %p158
      %p160 = scmp.ne.s32.totalorder %s152, %s155
      %p161 = scmp.eq.s32.totalorder %s13, 0
      %p162 = por %p160, %p161
      %p163 = scmp.ne.s32.totalorder %s152, %s155
      %p164 = scmp.eq.s32.totalorder %s18, 1
      %p165 = por %p163, %p164
      %p166 = scmp.ne.s32.totalorder %s155, %s156
      %p167 = scmp.eq.s32.totalorder %s18, 0
      %p168 = por %p166, %p167
      %p169 = scmp.ne.s32.totalorder %s155, %s156
      %p170 = scmp.eq.s32.totalorder %s19, 1
      %p171 = por %p169, %p170
      %p173 = scmp.ne.s32.totalorder %s156, %s172
      %p174 = scmp.eq.s32.totalorder %s19, 0
      %p175 = por %p173, %p174
      %p176 = scmp.le.s32.totalorder 1, %s13
      %p177 = scmp.lt.s32.totalorder %s13, 3
      %p178 = pnand %p176, %p177
      %p179 = pneg %p178
      // Predicated region
      $region9: #{tpu_custom_call.1} parent=5 // pred_check
        _
      $region10: #{tpu_custom_call.1} parent=5 // pred_check_branch
        %181 = sbr.rel (%p178) target = $region12
      $region11: #{tpu_custom_call.1} parent=5 // pred_region
        %s182 = ssub.s32 %s13, 1
        // Predicated region
        $region13: #{tpu_custom_call.1} parent=11 // pred_check
          %p183 = pneg %p88
        $region14: #{tpu_custom_call.1} parent=11 // pred_check_branch
          %185 = sbr.rel (%p183) target = $region16
        $region15: #{tpu_custom_call.1} parent=11 // pred_region
          %p186 = scmp.lt.s32.totalorder %s25, 0
          %s187 = scalar_select %p186, %s25, 0
          %p188 = scmp.lt.s32.totalorder %s24, 0
          %s189 = scalar_select %p188, %s24, 0
          %s190 = sadd.s32 %s189, %s187
          %s191 = smul.addr %s190, 2
          %s192 = scalar_lea.vmem %s1, %s191
        $region16: #{tpu_custom_call.1} parent=11 // pred_fallthru
          _
        // Predicated region
        $region17: #{tpu_custom_call.1} parent=11 // pred_check
          %p193 = pneg %p114
        $region18: #{tpu_custom_call.1} parent=11 // pred_check_branch
          %195 = sbr.rel (%p193) target = $region20
        $region19: #{tpu_custom_call.1} parent=11 // pred_region
          %p196 = scmp.lt.s32.totalorder %s24, 0
          %s197 = scalar_select %p196, %s24, 0
          %s198 = scalar_lea.vmem %s2, %s197
        $region20: #{tpu_custom_call.1} parent=11 // pred_fallthru
          _
        // Predicated region
        $region21: #{tpu_custom_call.1} parent=11 // pred_check
          %p199 = pneg %p140
        $region22: #{tpu_custom_call.1} parent=11 // pred_check_branch
          %201 = sbr.rel (%p199) target = $region24
        $region23: #{tpu_custom_call.1} parent=11 // pred_region
          %p202 = scmp.lt.s32.totalorder %s24, 0
          %s203 = scalar_select %p202, %s24, 0
          %s204 = scalar_lea.vmem %s3, %s203
        $region24: #{tpu_custom_call.1} parent=11 // pred_fallthru
          _
      $region12: #{tpu_custom_call.1} parent=5 // pred_fallthru
        _
      %p205 = scmp.lt.s32.totalorder %s13, 2
      // Predicated region
      $region25: #{tpu_custom_call.1} parent=5 // pred_check
        %p206 = pneg %p205
      $region26: #{tpu_custom_call.1} parent=5 // pred_check_branch
        %208 = sbr.rel (%p206) target = $region28
      $region27: #{tpu_custom_call.1} parent=5 // pred_region
        // Predicated region
        $region29: #{tpu_custom_call.1} parent=27 // pred_check
          %p209 = pneg %p54
        $region30: #{tpu_custom_call.1} parent=27 // pred_check_branch
          %211 = sbr.rel (%p209) target = $region32
        $region31: #{tpu_custom_call.1} parent=27 // pred_region
          %s212 = smul.u32 32, %s20
          %p213 = scmp.lt.s32.totalorder %s212, 63
          %s214 = scalar_select %p213, %s212, 63
          %p215 = scmp.lt.s32.totalorder %s22, 0
          %s216 = scalar_select %p215, %s22, 0
          %s217 = sadd.s32 %s216, %s214
          %s218 = smul.addr %s217, 4
          %s219 = scalar_lea.vmem %s0, %s218
          %s220 = smul.u32 32, %s20
        $region32: #{tpu_custom_call.1} parent=27 // pred_fallthru
          _
      $region28: #{tpu_custom_call.1} parent=5 // pred_fallthru
        _
      %p221 = scmp.le.s32.totalorder 1, %s13
      %p222 = scmp.lt.s32.totalorder %s13, 3
      %p223 = pnand %p221, %p222
      %p224 = pneg %p223
      // Predicated region
      $region33: #{tpu_custom_call.1} parent=5 // pred_check
        _
      $region34: #{tpu_custom_call.1} parent=5 // pred_check_branch
        %226 = sbr.rel (%p223) target = $region36
      $region35: #{tpu_custom_call.1} parent=5 // pred_region
        %s227 = ssub.s32 %s13, 1
        %s228 = smul.u32 32, %s23
        %p229 = scmp.lt.s32.totalorder %s228, 63
        %s230 = scalar_select %p229, %s228, 63
        %p231 = scmp.lt.s32.totalorder %s25, 0
        %s232 = scalar_select %p231, %s25, 0
        %s233 = sadd.s32 %s232, %s230
        %s234 = smul.addr %s233, 4
        %s235 = scalar_lea.vmem %s0, %s234
        %p236 = pneg %p60
        %p237 = pneg %p57
        %p238 = scmp.lt.s32.totalorder %s25, 0
        %s239 = scalar_select %p238, %s25, 0
        %p240 = scmp.lt.s32.totalorder %s24, 0
        %s241 = scalar_select %p240, %s24, 0
        %s242 = sadd.s32 %s241, %s239
        %s243 = smul.addr %s242, 2
        %s244 = scalar_lea.vmem %s1, %s243
        %p245 = pneg %p88
        %p246 = pneg %p85
        %p247 = scmp.lt.s32.totalorder %s24, 0
        %s248 = scalar_select %p247, %s24, 0
        %s249 = scalar_lea.vmem %s2, %s248
        %p250 = pneg %p114
        %p251 = pneg %p111
        %p252 = scmp.lt.s32.totalorder %s24, 0
        %s253 = scalar_select %p252, %s24, 0
        %s254 = scalar_lea.vmem %s3, %s253
        %p255 = pneg %p140
        %p256 = pneg %p137
        %p257 = pneg %p168
        %p258 = pneg %p165
        %s259 = sand.u32 %s155, 1
        %s260 = scalar_lea.sflag [#allocation4], %s259
        %s261 = sand.u32 %s155, 1
        %s262 = smul.addr %s261, 128
        %s263 = scalar_lea.vmem [#allocation3], %s262
        %s264 = smul.u32 32, %s23
        %p265 = scmp.lt.s32.totalorder %s264, 63
        %s266 = scalar_select %p265, %s264, 63
        %p267 = scmp.lt.s32.totalorder %s25, 0
        %s268 = scalar_select %p267, %s25, 0
        %s269 = sadd.s32 %s268, %s266
        %s270 = smul.addr %s269, 4
        %s271 = scalar_lea.vmem %s0, %s270
        %s272 = smul.u32 32, %s23
        %p273 = scmp.lt.s32.totalorder %s25, 0
        %s274 = scalar_select %p273, %s25, 0
        %p275 = scmp.lt.s32.totalorder %s24, 0
        %s276 = scalar_select %p275, %s24, 0
        %s277 = sadd.s32 %s276, %s274
        %s278 = smul.addr %s277, 2
        %s279 = scalar_lea.vmem %s1, %s278
        %p280 = scmp.lt.s32.totalorder %s24, 0
        %s281 = scalar_select %p280, %s24, 0
        %s282 = scalar_lea.vmem %s2, %s281
        %p283 = scmp.lt.s32.totalorder %s24, 0
        %s284 = scalar_select %p283, %s24, 0
        %s285 = scalar_lea.vmem %s3, %s284
        %s286 = smul.u32 32, %s23
        %p288 = scmp.eq.s32.totalorder %s25, 0
        // Predicated region
        $region37: #{tpu_custom_call.1} parent=35 // pred_check
          %p289 = pneg %p288
        $region38: #{tpu_custom_call.1} parent=35 // pred_check_branch
          %291 = sbr.rel (%p289) target = $region40
        $region39: #{tpu_custom_call.1} parent=35 // pred_region
          %292 = vst [vmem:[#allocation2] sm:$0xff] 0.0
          %293 = vst [vmem:[#allocation2 + $0x8] sm:$0xff] 0.0
          %294 = vst [vmem:[#allocation2 + $0x10] sm:$0xff] 0.0
          %295 = vst [vmem:[#allocation2 + $0x18] sm:$0xff] 0.0
          %296 = vst [vmem:[#allocation2 + $0x20] sm:$0xff] 0.0
          %297 = vst [vmem:[#allocation2 + $0x28] sm:$0xff] 0.0
          %298 = vst [vmem:[#allocation2 + $0x30] sm:$0xff] 0.0
          %299 = vst [vmem:[#allocation2 + $0x38] sm:$0xff] 0.0
          %300 = vst [vmem:[#allocation2 + $0x40] sm:$0xff] 0.0
          %301 = vst [vmem:[#allocation2 + $0x48] sm:$0xff] 0.0
          %302 = vst [vmem:[#allocation2 + $0x50] sm:$0xff] 0.0
          %303 = vst [vmem:[#allocation2 + $0x58] sm:$0xff] 0.0
          %304 = vst [vmem:[#allocation2 + $0x60] sm:$0xff] 0.0
          %305 = vst [vmem:[#allocation2 + $0x68] sm:$0xff] 0.0
          %306 = vst [vmem:[#allocation2 + $0x70] sm:$0xff] 0.0
          %307 = vst [vmem:[#allocation2 + $0x78] sm:$0xff] 0.0
          %308 = vst [vmem:[#allocation2 + $0x80] sm:$0xff] 0.0
          %309 = vst [vmem:[#allocation2 + $0x88] sm:$0xff] 0.0
          %310 = vst [vmem:[#allocation2 + $0x90] sm:$0xff] 0.0
          %311 = vst [vmem:[#allocation2 + $0x98] sm:$0xff] 0.0
          %312 = vst [vmem:[#allocation2 + $0xa0] sm:$0xff] 0.0
          %313 = vst [vmem:[#allocation2 + $0xa8] sm:$0xff] 0.0
          %314 = vst [vmem:[#allocation2 + $0xb0] sm:$0xff] 0.0
          %315 = vst [vmem:[#allocation2 + $0xb8] sm:$0xff] 0.0
          %316 = vst [vmem:[#allocation2 + $0xc0] sm:$0xff] 0.0
          %317 = vst [vmem:[#allocation2 + $0xc8] sm:$0xff] 0.0
          %318 = vst [vmem:[#allocation2 + $0xd0] sm:$0xff] 0.0
          %319 = vst [vmem:[#allocation2 + $0xd8] sm:$0xff] 0.0
          %320 = vst [vmem:[#allocation2 + $0xe0] sm:$0xff] 0.0
          %321 = vst [vmem:[#allocation2 + $0xe8] sm:$0xff] 0.0
          %322 = vst [vmem:[#allocation2 + $0xf0] sm:$0xff] 0.0
          %323 = vst [vmem:[#allocation2 + $0xf8] sm:$0xff] 0.0
        $region40: #{tpu_custom_call.1} parent=35 // pred_fallthru
          _
        %v324 = vld [vmem:[#allocation2] sm:$0xff]
        %v325 = vld [vmem:[#allocation2 + $0x8] sm:$0xff]
        %v326 = vld [vmem:[#allocation2 + $0x10] sm:$0xff]
        %v327 = vld [vmem:[#allocation2 + $0x18] sm:$0xff]
        %v328 = vld [vmem:[#allocation2 + $0x20] sm:$0xff]
        %v329 = vld [vmem:[#allocation2 + $0x28] sm:$0xff]
        %v330 = vld [vmem:[#allocation2 + $0x30] sm:$0xff]
        %v331 = vld [vmem:[#allocation2 + $0x38] sm:$0xff]
        %v332 = vld [vmem:[#allocation2 + $0x40] sm:$0xff]
        %v333 = vld [vmem:[#allocation2 + $0x48] sm:$0xff]
        %v334 = vld [vmem:[#allocation2 + $0x50] sm:$0xff]
        %v335 = vld [vmem:[#allocation2 + $0x58] sm:$0xff]
        %v336 = vld [vmem:[#allocation2 + $0x60] sm:$0xff]
        %v337 = vld [vmem:[#allocation2 + $0x68] sm:$0xff]
        %v338 = vld [vmem:[#allocation2 + $0x70] sm:$0xff]
        %v339 = vld [vmem:[#allocation2 + $0x78] sm:$0xff]
        %v340 = vld [vmem:[#allocation2 + $0x80] sm:$0xff]
        %v341 = vld [vmem:[#allocation2 + $0x88] sm:$0xff]
        %v342 = vld [vmem:[#allocation2 + $0x90] sm:$0xff]
        %v343 = vld [vmem:[#allocation2 + $0x98] sm:$0xff]
        %v344 = vld [vmem:[#allocation2 + $0xa0] sm:$0xff]
        %v345 = vld [vmem:[#allocation2 + $0xa8] sm:$0xff]
        %v346 = vld [vmem:[#allocation2 + $0xb0] sm:$0xff]
        %v347 = vld [vmem:[#allocation2 + $0xb8] sm:$0xff]
        %v348 = vld [vmem:[#allocation2 + $0xc0] sm:$0xff]
        %v349 = vld [vmem:[#allocation2 + $0xc8] sm:$0xff]
        %v350 = vld [vmem:[#allocation2 + $0xd0] sm:$0xff]
        %v351 = vld [vmem:[#allocation2 + $0xd8] sm:$0xff]
        %v352 = vld [vmem:[#allocation2 + $0xe0] sm:$0xff]
        %v353 = vld [vmem:[#allocation2 + $0xe8] sm:$0xff]
        %v354 = vld [vmem:[#allocation2 + $0xf0] sm:$0xff]
        %v355 = vld [vmem:[#allocation2 + $0xf8] sm:$0xff]
        %v356 = vld [vmem:[%s271] sm:$0xf]
        %v357 = vld [vmem:[%s271 + $0x4] sm:$0xf]
        %v358 = vld [vmem:[%s271 + $0x8] sm:$0xf]
        %v359 = vld [vmem:[%s271 + $0xc] sm:$0xf]
        %v360 = vld [vmem:[%s271 + $0x10] sm:$0xf]
        %v361 = vld [vmem:[%s271 + $0x14] sm:$0xf]
        %v362 = vld [vmem:[%s271 + $0x18] sm:$0xf]
        %v363 = vld [vmem:[%s271 + $0x1c] sm:$0xf]
        %v364 = vld [vmem:[%s271 + $0x20] sm:$0xf]
        %v365 = vld [vmem:[%s271 + $0x24] sm:$0xf]
        %v366 = vld [vmem:[%s271 + $0x28] sm:$0xf]
        %v367 = vld [vmem:[%s271 + $0x2c] sm:$0xf]
        %v368 = vld [vmem:[%s271 + $0x30] sm:$0xf]
        %v369 = vld [vmem:[%s271 + $0x34] sm:$0xf]
        %v370 = vld [vmem:[%s271 + $0x38] sm:$0xf]
        %v371 = vld [vmem:[%s271 + $0x3c] sm:$0xf]
        %v372 = vld [vmem:[%s271 + $0x40] sm:$0xf]
        %v373 = vld [vmem:[%s271 + $0x44] sm:$0xf]
        %v374 = vld [vmem:[%s271 + $0x48] sm:$0xf]
        %v375 = vld [vmem:[%s271 + $0x4c] sm:$0xf]
        %v376 = vld [vmem:[%s271 + $0x50] sm:$0xf]
        %v377 = vld [vmem:[%s271 + $0x54] sm:$0xf]
        %v378 = vld [vmem:[%s271 + $0x58] sm:$0xf]
        %v379 = vld [vmem:[%s271 + $0x5c] sm:$0xf]
        %v380 = vld [vmem:[%s271 + $0x60] sm:$0xf]
        %v381 = vld [vmem:[%s271 + $0x64] sm:$0xf]
        %v382 = vld [vmem:[%s271 + $0x68] sm:$0xf]
        %v383 = vld [vmem:[%s271 + $0x6c] sm:$0xf]
        %v384 = vld [vmem:[%s271 + $0x70] sm:$0xf]
        %v385 = vld [vmem:[%s271 + $0x74] sm:$0xf]
        %v386 = vld [vmem:[%s271 + $0x78] sm:$0xf]
        %v387 = vld [vmem:[%s271 + $0x7c] sm:$0xf]
        %v388 = vld [vmem:[%s279] sm:$0x3]
        %v421 = vunpack.c.l.b16 %v356
        %v422 = vunpack.c.l.b16 %v357
        %v423 = vunpack.c.l.b16 %v358
        %v424 = vunpack.c.l.b16 %v359
        %v425 = vunpack.c.l.b16 %v360
        %v426 = vunpack.c.l.b16 %v361
        %v427 = vunpack.c.l.b16 %v362
        %v428 = vunpack.c.l.b16 %v363
        %v429 = vunpack.c.l.b16 %v364
        %v430 = vunpack.c.l.b16 %v365
        %v431 = vunpack.c.l.b16 %v366
        %v432 = vunpack.c.l.b16 %v367
        %v433 = vunpack.c.l.b16 %v368
        %v434 = vunpack.c.l.b16 %v369
        %v435 = vunpack.c.l.b16 %v370
        %v436 = vunpack.c.l.b16 %v371
        %v437 = vunpack.c.l.b16 %v372
        %v438 = vunpack.c.l.b16 %v373
        %v439 = vunpack.c.l.b16 %v374
        %v440 = vunpack.c.l.b16 %v375
        %v441 = vunpack.c.l.b16 %v376
        %v442 = vunpack.c.l.b16 %v377
        %v443 = vunpack.c.l.b16 %v378
        %v444 = vunpack.c.l.b16 %v379
        %v445 = vunpack.c.l.b16 %v380
        %v446 = vunpack.c.l.b16 %v381
        %v447 = vunpack.c.l.b16 %v382
        %v448 = vunpack.c.l.b16 %v383
        %v449 = vunpack.c.l.b16 %v384
        %v450 = vunpack.c.l.b16 %v385
        %v451 = vunpack.c.l.b16 %v386
        %v452 = vunpack.c.l.b16 %v387
        %v453 = vpack.c.b16 %v422, %v421
        %v454 = vpack.c.b16 %v424, %v423
        %v455 = vpack.c.b16 %v426, %v425
        %v456 = vpack.c.b16 %v428, %v427
        %v457 = vpack.c.b16 %v430, %v429
        %v458 = vpack.c.b16 %v432, %v431
        %v459 = vpack.c.b16 %v434, %v433
        %v460 = vpack.c.b16 %v436, %v435
        %v461 = vpack.c.b16 %v438, %v437
        %v462 = vpack.c.b16 %v440, %v439
        %v463 = vpack.c.b16 %v442, %v441
        %v464 = vpack.c.b16 %v444, %v443
        %v465 = vpack.c.b16 %v446, %v445
        %v466 = vpack.c.b16 %v448, %v447
        %v467 = vpack.c.b16 %v450, %v449
        %v468 = vpack.c.b16 %v452, %v451
        %vm469 = vcmask 31744
        %v471 = vsel %vm469, %v453, 0
        %v474 = vsel %vm469, %v454, 0
        %v477 = vsel %vm469, %v455, 0
        %v480 = vsel %vm469, %v456, 0
        %v483 = vsel %vm469, %v457, 0
        %v486 = vsel %vm469, %v458, 0
        %v489 = vsel %vm469, %v459, 0
        %v492 = vsel %vm469, %v460, 0
        %v495 = vsel %vm469, %v461, 0
        %v498 = vsel %vm469, %v462, 0
        %v501 = vsel %vm469, %v463, 0
        %v504 = vsel %vm469, %v464, 0
        %v507 = vsel %vm469, %v465, 0
        %v510 = vsel %vm469, %v466, 0
        %v513 = vsel %vm469, %v467, 0
        %v516 = vsel %vm469, %v468, 0
        %vm518 = vcmask 1041408
        %v520 = vsel %vm518, %v388, 0
        %522 = vmatprep.subr.bf16.mxu0 0
        %523 = vmatpush1.bf16.msra.mxu0 0
        %524 = vmatprep.subr.bf16.mxu0 0
        %525 = vmatpush1.bf16.msra.mxu0 0
        %526 = vmatprep.subr.bf16.mxu0 0
        %527 = vmatpush1.bf16.msra.mxu0 0
        %528 = vmatprep.subr.bf16.mxu0 0
        %529 = vmatpush1.bf16.msra.mxu0 0
        %530 = vmatprep.subr.bf16.mxu0 0
        %531 = vmatpush1.bf16.msra.mxu0 0
        %532 = vmatprep.subr.bf16.mxu0 0
        %533 = vmatpush1.bf16.msra.mxu0 0
        %534 = vmatprep.subr.bf16.mxu0 0
        %535 = vmatpush1.bf16.msra.mxu0 0
        %536 = vmatprep.subr.bf16.mxu0 0
        %537 = vmatpush1.bf16.msra.mxu0 %v520
        %538 = vmatprep.subr.bf16.mxu0 0
        %539 = vmatpush2.bf16.msra.mxu0 0
        %540 = vmatprep.subr.bf16.mxu0 0
        %541 = vmatpush2.bf16.msra.mxu0 0
        %542 = vmatprep.subr.bf16.mxu0 0
        %543 = vmatpush2.bf16.msra.mxu0 0
        %544 = vmatprep.subr.bf16.mxu0 0
        %545 = vmatpush2.bf16.msra.mxu0 0
        %546 = vmatprep.subr.bf16.mxu0 0
        %547 = vmatpush2.bf16.msra.mxu0 0
        %548 = vmatprep.subr.bf16.mxu0 0
        %549 = vmatpush2.bf16.msra.mxu0 0
        %550 = vmatprep.subr.bf16.mxu0 0
        %551 = vmatpush2.bf16.msra.mxu0 0
        %552 = vmatprep.subr.bf16.mxu0 0
        %553 = vmatpush2.bf16.msra.mxu0 0
        %554 = vmatprep.mubr.bf16.mxu0 0
        %555 = vmatmul.mubr.bf16.gmra.mxu0 %v471
        %v556 = vpop.f32.mrf.mxu0
        %v557 = vadd.f32 0.0, %v556
        %v558 = vpop.f32.mrf.mxu0
        %v559 = vpop.f32.mrf.mxu0
        %v560 = vadd.f32 0.0, %v559
        %v561 = vpop.f32.mrf.mxu0
        %562 = vmatprep.mubr.bf16.mxu0 0
        %563 = vmatmul.mubr.bf16.gmra.mxu0 %v474
        %v564 = vpop.f32.mrf.mxu0
        %v565 = vadd.f32 0.0, %v564
        %v566 = vpop.f32.mrf.mxu0
        %v567 = vpop.f32.mrf.mxu0
        %v568 = vadd.f32 0.0, %v567
        %v569 = vpop.f32.mrf.mxu0
        %570 = vmatprep.mubr.bf16.mxu0 0
        %571 = vmatmul.mubr.bf16.gmra.mxu0 %v477
        %v572 = vpop.f32.mrf.mxu0
        %v573 = vadd.f32 0.0, %v572
        %v574 = vpop.f32.mrf.mxu0
        %v575 = vpop.f32.mrf.mxu0
        %v576 = vadd.f32 0.0, %v575
        %v577 = vpop.f32.mrf.mxu0
        %578 = vmatprep.mubr.bf16.mxu0 0
        %579 = vmatmul.mubr.bf16.gmra.mxu0 %v480
        %v580 = vpop.f32.mrf.mxu0
        %v581 = vadd.f32 0.0, %v580
        %v582 = vpop.f32.mrf.mxu0
        %v583 = vpop.f32.mrf.mxu0
        %v584 = vadd.f32 0.0, %v583
        %v585 = vpop.f32.mrf.mxu0
        %586 = vmatprep.mubr.bf16.mxu0 0
        %587 = vmatmul.mubr.bf16.gmra.mxu0 %v483
        %v588 = vpop.f32.mrf.mxu0
        %v589 = vadd.f32 0.0, %v588
        %v590 = vpop.f32.mrf.mxu0
        %v591 = vpop.f32.mrf.mxu0
        %v592 = vadd.f32 0.0, %v591
        %v593 = vpop.f32.mrf.mxu0
        %594 = vmatprep.mubr.bf16.mxu0 0
        %595 = vmatmul.mubr.bf16.gmra.mxu0 %v486
        %v596 = vpop.f32.mrf.mxu0
        %v597 = vadd.f32 0.0, %v596
        %v598 = vpop.f32.mrf.mxu0
        %v599 = vpop.f32.mrf.mxu0
        %v600 = vadd.f32 0.0, %v599
        %v601 = vpop.f32.mrf.mxu0
        %602 = vmatprep.mubr.bf16.mxu0 0
        %603 = vmatmul.mubr.bf16.gmra.mxu0 %v489
        %v604 = vpop.f32.mrf.mxu0
        %v605 = vadd.f32 0.0, %v604
        %v606 = vpop.f32.mrf.mxu0
        %v607 = vpop.f32.mrf.mxu0
        %v608 = vadd.f32 0.0, %v607
        %v609 = vpop.f32.mrf.mxu0
        %610 = vmatprep.mubr.bf16.mxu0 0
        %611 = vmatmul.mubr.bf16.gmra.mxu0 %v492
        %v612 = vpop.f32.mrf.mxu0
        %v613 = vadd.f32 0.0, %v612
        %v614 = vpop.f32.mrf.mxu0
        %v615 = vpop.f32.mrf.mxu0
        %v616 = vadd.f32 0.0, %v615
        %v617 = vpop.f32.mrf.mxu0
        %618 = vmatprep.mubr.bf16.mxu0 0
        %619 = vmatmul.mubr.bf16.gmra.mxu0 %v495
        %v620 = vpop.f32.mrf.mxu0
        %v621 = vadd.f32 0.0, %v620
        %v622 = vpop.f32.mrf.mxu0
        %v623 = vpop.f32.mrf.mxu0
        %v624 = vadd.f32 0.0, %v623
        %v625 = vpop.f32.mrf.mxu0
        %626 = vmatprep.mubr.bf16.mxu0 0
        %627 = vmatmul.mubr.bf16.gmra.mxu0 %v498
        %v628 = vpop.f32.mrf.mxu0
        %v629 = vadd.f32 0.0, %v628
        %v630 = vpop.f32.mrf.mxu0
        %v631 = vpop.f32.mrf.mxu0
        %v632 = vadd.f32 0.0, %v631
        %v633 = vpop.f32.mrf.mxu0
        %634 = vmatprep.mubr.bf16.mxu0 0
        %635 = vmatmul.mubr.bf16.gmra.mxu0 %v501
        %v636 = vpop.f32.mrf.mxu0
        %v637 = vadd.f32 0.0, %v636
        %v638 = vpop.f32.mrf.mxu0
        %v639 = vpop.f32.mrf.mxu0
        %v640 = vadd.f32 0.0, %v639
        %v641 = vpop.f32.mrf.mxu0
        %642 = vmatprep.mubr.bf16.mxu0 0
        %643 = vmatmul.mubr.bf16.gmra.mxu0 %v504
        %v644 = vpop.f32.mrf.mxu0
        %v645 = vadd.f32 0.0, %v644
        %v646 = vpop.f32.mrf.mxu0
        %v647 = vpop.f32.mrf.mxu0
        %v648 = vadd.f32 0.0, %v647
        %v649 = vpop.f32.mrf.mxu0
        %650 = vmatprep.mubr.bf16.mxu0 0
        %651 = vmatmul.mubr.bf16.gmra.mxu0 %v507
        %v652 = vpop.f32.mrf.mxu0
        %v653 = vadd.f32 0.0, %v652
        %v654 = vpop.f32.mrf.mxu0
        %v655 = vpop.f32.mrf.mxu0
        %v656 = vadd.f32 0.0, %v655
        %v657 = vpop.f32.mrf.mxu0
        %658 = vmatprep.mubr.bf16.mxu0 0
        %659 = vmatmul.mubr.bf16.gmra.mxu0 %v510
        %v660 = vpop.f32.mrf.mxu0
        %v661 = vadd.f32 0.0, %v660
        %v662 = vpop.f32.mrf.mxu0
        %v663 = vpop.f32.mrf.mxu0
        %v664 = vadd.f32 0.0, %v663
        %v665 = vpop.f32.mrf.mxu0
        %666 = vmatprep.mubr.bf16.mxu0 0
        %667 = vmatmul.mubr.bf16.gmra.mxu0 %v513
        %v668 = vpop.f32.mrf.mxu0
        %v669 = vadd.f32 0.0, %v668
        %v670 = vpop.f32.mrf.mxu0
        %v671 = vpop.f32.mrf.mxu0
        %v672 = vadd.f32 0.0, %v671
        %v673 = vpop.f32.mrf.mxu0
        %674 = vmatprep.mubr.bf16.mxu0 0
        %675 = vmatmul.mubr.bf16.gmra.mxu0 %v516
        %v676 = vpop.f32.mrf.mxu0
        %v677 = vadd.f32 0.0, %v676
        %v678 = vpop.f32.mrf.mxu0
        %v679 = vpop.f32.mrf.mxu0
        %v680 = vadd.f32 0.0, %v679
        %v681 = vpop.f32.mrf.mxu0
        %682 = vdwg.mxu0
        %v683 = vadd.f32 %v324, %v557
        %v684 = vadd.f32 %v325, %v560
        %v685 = vadd.f32 %v326, %v565
        %v686 = vadd.f32 %v327, %v568
        %v687 = vadd.f32 %v328, %v573
        %v688 = vadd.f32 %v329, %v576
        %v689 = vadd.f32 %v330, %v581
        %v690 = vadd.f32 %v331, %v584
        %v691 = vadd.f32 %v332, %v589
        %v692 = vadd.f32 %v333, %v592
        %v693 = vadd.f32 %v334, %v597
        %v694 = vadd.f32 %v335, %v600
        %v695 = vadd.f32 %v336, %v605
        %v696 = vadd.f32 %v337, %v608
        %v697 = vadd.f32 %v338, %v613
        %v698 = vadd.f32 %v339, %v616
        %v699 = vadd.f32 %v340, %v621
        %v700 = vadd.f32 %v341, %v624
        %v701 = vadd.f32 %v342, %v629
        %v702 = vadd.f32 %v343, %v632
        %v703 = vadd.f32 %v344, %v637
        %v704 = vadd.f32 %v345, %v640
        %v705 = vadd.f32 %v346, %v645
        %v706 = vadd.f32 %v347, %v648
        %v707 = vadd.f32 %v348, %v653
        %v708 = vadd.f32 %v349, %v656
        %v709 = vadd.f32 %v350, %v661
        %v710 = vadd.f32 %v351, %v664
        %v711 = vadd.f32 %v352, %v669
        %v712 = vadd.f32 %v353, %v672
        %v713 = vadd.f32 %v354, %v677
        %v714 = vadd.f32 %v355, %v680
        %715 = vst [vmem:[#allocation2] sm:$0xff] %v683
        %716 = vst [vmem:[#allocation2 + $0x8] sm:$0xff] %v684
        %717 = vst [vmem:[#allocation2 + $0x10] sm:$0xff] %v685
        %718 = vst [vmem:[#allocation2 + $0x18] sm:$0xff] %v686
        %719 = vst [vmem:[#allocation2 + $0x20] sm:$0xff] %v687
        %720 = vst [vmem:[#allocation2 + $0x28] sm:$0xff] %v688
        %721 = vst [vmem:[#allocation2 + $0x30] sm:$0xff] %v689
        %722 = vst [vmem:[#allocation2 + $0x38] sm:$0xff] %v690
        %723 = vst [vmem:[#allocation2 + $0x40] sm:$0xff] %v691
        %724 = vst [vmem:[#allocation2 + $0x48] sm:$0xff] %v692
        %725 = vst [vmem:[#allocation2 + $0x50] sm:$0xff] %v693
        %726 = vst [vmem:[#allocation2 + $0x58] sm:$0xff] %v694
        %727 = vst [vmem:[#allocation2 + $0x60] sm:$0xff] %v695
        %728 = vst [vmem:[#allocation2 + $0x68] sm:$0xff] %v696
        %729 = vst [vmem:[#allocation2 + $0x70] sm:$0xff] %v697
        %730 = vst [vmem:[#allocation2 + $0x78] sm:$0xff] %v698
        %731 = vst [vmem:[#allocation2 + $0x80] sm:$0xff] %v699
        %732 = vst [vmem:[#allocation2 + $0x88] sm:$0xff] %v700
        %733 = vst [vmem:[#allocation2 + $0x90] sm:$0xff] %v701
        %734 = vst [vmem:[#allocation2 + $0x98] sm:$0xff] %v702
        %735 = vst [vmem:[#allocation2 + $0xa0] sm:$0xff] %v703
        %736 = vst [vmem:[#allocation2 + $0xa8] sm:$0xff] %v704
        %737 = vst [vmem:[#allocation2 + $0xb0] sm:$0xff] %v705
        %738 = vst [vmem:[#allocation2 + $0xb8] sm:$0xff] %v706
        %739 = vst [vmem:[#allocation2 + $0xc0] sm:$0xff] %v707
        %740 = vst [vmem:[#allocation2 + $0xc8] sm:$0xff] %v708
        %741 = vst [vmem:[#allocation2 + $0xd0] sm:$0xff] %v709
        %742 = vst [vmem:[#allocation2 + $0xd8] sm:$0xff] %v710
        %743 = vst [vmem:[#allocation2 + $0xe0] sm:$0xff] %v711
        %744 = vst [vmem:[#allocation2 + $0xe8] sm:$0xff] %v712
        %745 = vst [vmem:[#allocation2 + $0xf0] sm:$0xff] %v713
        %746 = vst [vmem:[#allocation2 + $0xf8] sm:$0xff] %v714
        // Predicated region
        $region41: #{tpu_custom_call.1} parent=35 // pred_check
          %p747 = pneg %p288
        $region42: #{tpu_custom_call.1} parent=35 // pred_check_branch
          %749 = sbr.rel (%p747) target = $region44
        $region43: #{tpu_custom_call.1} parent=35 // pred_region
          %v750 = vld [vmem:[#allocation2] sm:$0xff]
          %v751 = vld [vmem:[#allocation2 + $0x8] sm:$0xff]
          %v752 = vld [vmem:[#allocation2 + $0x10] sm:$0xff]
          %v753 = vld [vmem:[#allocation2 + $0x18] sm:$0xff]
          %v754 = vld [vmem:[#allocation2 + $0x20] sm:$0xff]
          %v755 = vld [vmem:[#allocation2 + $0x28] sm:$0xff]
          %v756 = vld [vmem:[#allocation2 + $0x30] sm:$0xff]
          %v757 = vld [vmem:[#allocation2 + $0x38] sm:$0xff]
          %v758 = vld [vmem:[#allocation2 + $0x40] sm:$0xff]
          %v759 = vld [vmem:[#allocation2 + $0x48] sm:$0xff]
          %v760 = vld [vmem:[#allocation2 + $0x50] sm:$0xff]
          %v761 = vld [vmem:[#allocation2 + $0x58] sm:$0xff]
          %v762 = vld [vmem:[#allocation2 + $0x60] sm:$0xff]
          %v763 = vld [vmem:[#allocation2 + $0x68] sm:$0xff]
          %v764 = vld [vmem:[#allocation2 + $0x70] sm:$0xff]
          %v765 = vld [vmem:[#allocation2 + $0x78] sm:$0xff]
          %v766 = vld [vmem:[#allocation2 + $0x80] sm:$0xff]
          %v767 = vld [vmem:[#allocation2 + $0x88] sm:$0xff]
          %v768 = vld [vmem:[#allocation2 + $0x90] sm:$0xff]
          %v769 = vld [vmem:[#allocation2 + $0x98] sm:$0xff]
          %v770 = vld [vmem:[#allocation2 + $0xa0] sm:$0xff]
          %v771 = vld [vmem:[#allocation2 + $0xa8] sm:$0xff]
          %v772 = vld [vmem:[#allocation2 + $0xb0] sm:$0xff]
          %v773 = vld [vmem:[#allocation2 + $0xb8] sm:$0xff]
          %v774 = vld [vmem:[#allocation2 + $0xc0] sm:$0xff]
          %v775 = vld [vmem:[#allocation2 + $0xc8] sm:$0xff]
          %v776 = vld [vmem:[#allocation2 + $0xd0] sm:$0xff]
          %v777 = vld [vmem:[#allocation2 + $0xd8] sm:$0xff]
          %v778 = vld [vmem:[#allocation2 + $0xe0] sm:$0xff]
          %v779 = vld [vmem:[#allocation2 + $0xe8] sm:$0xff]
          %v780 = vld [vmem:[#allocation2 + $0xf0] sm:$0xff]
          %v781 = vld [vmem:[#allocation2 + $0xf8] sm:$0xff]
          %v782 = vld [vmem:[%s282] sm:$0x1]
          %v784 = vlaneseq
          %v785 = vshrl.u32 %v784, 7
          %v786 = vsub.s32 0, %v785
          %v787 = vrot.slane %v782, %v786
          %v789 = vmul.f32 %v750, %v787
          %v790 = vmul.f32 %v751, %v787
          %v791 = vmul.f32 %v752, %v787
          %v792 = vmul.f32 %v753, %v787
          %v793 = vmul.f32 %v754, %v787
          %v794 = vmul.f32 %v755, %v787
          %v795 = vmul.f32 %v756, %v787
          %v796 = vmul.f32 %v757, %v787
          %v797 = vmul.f32 %v758, %v787
          %v798 = vmul.f32 %v759, %v787
          %v799 = vmul.f32 %v760, %v787
          %v800 = vmul.f32 %v761, %v787
          %v801 = vmul.f32 %v762, %v787
          %v802 = vmul.f32 %v763, %v787
          %v803 = vmul.f32 %v764, %v787
          %v804 = vmul.f32 %v765, %v787
          %v805 = vmul.f32 %v766, %v787
          %v806 = vmul.f32 %v767, %v787
          %v807 = vmul.f32 %v768, %v787
          %v808 = vmul.f32 %v769, %v787
          %v809 = vmul.f32 %v770, %v787
          %v810 = vmul.f32 %v771, %v787
          %v811 = vmul.f32 %v772, %v787
          %v812 = vmul.f32 %v773, %v787
          %v813 = vmul.f32 %v774, %v787
          %v814 = vmul.f32 %v775, %v787
          %v815 = vmul.f32 %v776, %v787
          %v816 = vmul.f32 %v777, %v787
          %v817 = vmul.f32 %v778, %v787
          %v818 = vmul.f32 %v779, %v787
          %v819 = vmul.f32 %v780, %v787
          %v820 = vmul.f32 %v781, %v787
          %v821 = vld [vmem:[%s285] sm:$0x1]
          %v823 = vlaneseq
          %v824 = vshrl.u32 %v823, 7
          %v825 = vsub.s32 0, %v824
          %v826 = vrot.slane %v821, %v825
          %v828 = vadd.f32 %v789, %v826
          %v829 = vadd.f32 %v790, %v826
          %v830 = vadd.f32 %v791, %v826
          %v831 = vadd.f32 %v792, %v826
          %v832 = vadd.f32 %v793, %v826
          %v833 = vadd.f32 %v794, %v826
          %v834 = vadd.f32 %v795, %v826
          %v835 = vadd.f32 %v796, %v826
          %v836 = vadd.f32 %v797, %v826
          %v837 = vadd.f32 %v798, %v826
          %v838 = vadd.f32 %v799, %v826
          %v839 = vadd.f32 %v800, %v826
          %v840 = vadd.f32 %v801, %v826
          %v841 = vadd.f32 %v802, %v826
          %v842 = vadd.f32 %v803, %v826
          %v843 = vadd.f32 %v804, %v826
          %v844 = vadd.f32 %v805, %v826
          %v845 = vadd.f32 %v806, %v826
          %v846 = vadd.f32 %v807, %v826
          %v847 = vadd.f32 %v808, %v826
          %v848 = vadd.f32 %v809, %v826
          %v849 = vadd.f32 %v810, %v826
          %v850 = vadd.f32 %v811, %v826
          %v851 = vadd.f32 %v812, %v826
          %v852 = vadd.f32 %v813, %v826
          %v853 = vadd.f32 %v814, %v826
          %v854 = vadd.f32 %v815, %v826
          %v855 = vadd.f32 %v816, %v826
          %v856 = vadd.f32 %v817, %v826
          %v857 = vadd.f32 %v818, %v826
          %v858 = vadd.f32 %v819, %v826
          %v859 = vadd.f32 %v820, %v826
          %v860 = vmax.f32 %v828, 0.0
          %v861 = vmax.f32 %v829, 0.0
          %v862 = vmax.f32 %v830, 0.0
          %v863 = vmax.f32 %v831, 0.0
          %v864 = vmax.f32 %v832, 0.0
          %v865 = vmax.f32 %v833, 0.0
          %v866 = vmax.f32 %v834, 0.0
          %v867 = vmax.f32 %v835, 0.0
          %v868 = vmax.f32 %v836, 0.0
          %v869 = vmax.f32 %v837, 0.0
          %v870 = vmax.f32 %v838, 0.0
          %v871 = vmax.f32 %v839, 0.0
          %v872 = vmax.f32 %v840, 0.0
          %v873 = vmax.f32 %v841, 0.0
          %v874 = vmax.f32 %v842, 0.0
          %v875 = vmax.f32 %v843, 0.0
          %v876 = vmax.f32 %v844, 0.0
          %v877 = vmax.f32 %v845, 0.0
          %v878 = vmax.f32 %v846, 0.0
          %v879 = vmax.f32 %v847, 0.0
          %v880 = vmax.f32 %v848, 0.0
          %v881 = vmax.f32 %v849, 0.0
          %v882 = vmax.f32 %v850, 0.0
          %v883 = vmax.f32 %v851, 0.0
          %v884 = vmax.f32 %v852, 0.0
          %v885 = vmax.f32 %v853, 0.0
          %v886 = vmax.f32 %v854, 0.0
          %v887 = vmax.f32 %v855, 0.0
          %v888 = vmax.f32 %v856, 0.0
          %v889 = vmax.f32 %v857, 0.0
          %v890 = vmax.f32 %v858, 0.0
          %v891 = vmax.f32 %v859, 0.0
          %v892 = vpack.c.bf16 %v861, %v860
          %v893 = vpack.c.bf16 %v863, %v862
          %v894 = vpack.c.bf16 %v865, %v864
          %v895 = vpack.c.bf16 %v867, %v866
          %v896 = vpack.c.bf16 %v869, %v868
          %v897 = vpack.c.bf16 %v871, %v870
          %v898 = vpack.c.bf16 %v873, %v872
          %v899 = vpack.c.bf16 %v875, %v874
          %v900 = vpack.c.bf16 %v877, %v876
          %v901 = vpack.c.bf16 %v879, %v878
          %v902 = vpack.c.bf16 %v881, %v880
          %v903 = vpack.c.bf16 %v883, %v882
          %v904 = vpack.c.bf16 %v885, %v884
          %v905 = vpack.c.bf16 %v887, %v886
          %v906 = vpack.c.bf16 %v889, %v888
          %v907 = vpack.c.bf16 %v891, %v890
          %v924 = vunpack.c.l.b16 %v892
          %v925 = vunpack.c.h.b16 %v892
          %v926 = vunpack.c.l.b16 %v893
          %v927 = vunpack.c.h.b16 %v893
          %v928 = vunpack.c.l.b16 %v894
          %v929 = vunpack.c.h.b16 %v894
          %v930 = vunpack.c.l.b16 %v895
          %v931 = vunpack.c.h.b16 %v895
          %v932 = vunpack.c.l.b16 %v896
          %v933 = vunpack.c.h.b16 %v896
          %v934 = vunpack.c.l.b16 %v897
          %v935 = vunpack.c.h.b16 %v897
          %v936 = vunpack.c.l.b16 %v898
          %v937 = vunpack.c.h.b16 %v898
          %v938 = vunpack.c.l.b16 %v899
          %v939 = vunpack.c.h.b16 %v899
          %v940 = vunpack.c.l.b16 %v900
          %v941 = vunpack.c.h.b16 %v900
          %v942 = vunpack.c.l.b16 %v901
          %v943 = vunpack.c.h.b16 %v901
          %v944 = vunpack.c.l.b16 %v902
          %v945 = vunpack.c.h.b16 %v902
          %v946 = vunpack.c.l.b16 %v903
          %v947 = vunpack.c.h.b16 %v903
          %v948 = vunpack.c.l.b16 %v904
          %v949 = vunpack.c.h.b16 %v904
          %v950 = vunpack.c.l.b16 %v905
          %v951 = vunpack.c.h.b16 %v905
          %v952 = vunpack.c.l.b16 %v906
          %v953 = vunpack.c.h.b16 %v906
          %v954 = vunpack.c.l.b16 %v907
          %v955 = vunpack.c.h.b16 %v907
          %v956 = vpack.c.b16 %v924, %v924
          %v957 = vpack.c.b16 %v925, %v925
          %v958 = vpack.c.b16 %v926, %v926
          %v959 = vpack.c.b16 %v927, %v927
          %v960 = vpack.c.b16 %v928, %v928
          %v961 = vpack.c.b16 %v929, %v929
          %v962 = vpack.c.b16 %v930, %v930
          %v963 = vpack.c.b16 %v931, %v931
          %v964 = vpack.c.b16 %v932, %v932
          %v965 = vpack.c.b16 %v933, %v933
          %v966 = vpack.c.b16 %v934, %v934
          %v967 = vpack.c.b16 %v935, %v935
          %v968 = vpack.c.b16 %v936, %v936
          %v969 = vpack.c.b16 %v937, %v937
          %v970 = vpack.c.b16 %v938, %v938
          %v971 = vpack.c.b16 %v939, %v939
          %v972 = vpack.c.b16 %v940, %v940
          %v973 = vpack.c.b16 %v941, %v941
          %v974 = vpack.c.b16 %v942, %v942
          %v975 = vpack.c.b16 %v943, %v943
          %v976 = vpack.c.b16 %v944, %v944
          %v977 = vpack.c.b16 %v945, %v945
          %v978 = vpack.c.b16 %v946, %v946
          %v979 = vpack.c.b16 %v947, %v947
          %v980 = vpack.c.b16 %v948, %v948
          %v981 = vpack.c.b16 %v949, %v949
          %v982 = vpack.c.b16 %v950, %v950
          %v983 = vpack.c.b16 %v951, %v951
          %v984 = vpack.c.b16 %v952, %v952
          %v985 = vpack.c.b16 %v953, %v953
          %v986 = vpack.c.b16 %v954, %v954
          %v987 = vpack.c.b16 %v955, %v955
          %1020 = vst [vmem:[%s263] sm:$0xf] %v956
          %1021 = vst [vmem:[%s263 + $0x4] sm:$0xf] %v957
          %1022 = vst [vmem:[%s263 + $0x8] sm:$0xf] %v958
          %1023 = vst [vmem:[%s263 + $0xc] sm:$0xf] %v959
          %1024 = vst [vmem:[%s263 + $0x10] sm:$0xf] %v960
          %1025 = vst [vmem:[%s263 + $0x14] sm:$0xf] %v961
          %1026 = vst [vmem:[%s263 + $0x18] sm:$0xf] %v962
          %1027 = vst [vmem:[%s263 + $0x1c] sm:$0xf] %v963
          %1028 = vst [vmem:[%s263 + $0x20] sm:$0xf] %v964
          %1029 = vst [vmem:[%s263 + $0x24] sm:$0xf] %v965
          %1030 = vst [vmem:[%s263 + $0x28] sm:$0xf] %v966
          %1031 = vst [vmem:[%s263 + $0x2c] sm:$0xf] %v967
          %1032 = vst [vmem:[%s263 + $0x30] sm:$0xf] %v968
          %1033 = vst [vmem:[%s263 + $0x34] sm:$0xf] %v969
          %1034 = vst [vmem:[%s263 + $0x38] sm:$0xf] %v970
          %1035 = vst [vmem:[%s263 + $0x3c] sm:$0xf] %v971
          %1036 = vst [vmem:[%s263 + $0x40] sm:$0xf] %v972
          %1037 = vst [vmem:[%s263 + $0x44] sm:$0xf] %v973
          %1038 = vst [vmem:[%s263 + $0x48] sm:$0xf] %v974
          %1039 = vst [vmem:[%s263 + $0x4c] sm:$0xf] %v975
          %1040 = vst [vmem:[%s263 + $0x50] sm:$0xf] %v976
          %1041 = vst [vmem:[%s263 + $0x54] sm:$0xf] %v977
          %1042 = vst [vmem:[%s263 + $0x58] sm:$0xf] %v978
          %1043 = vst [vmem:[%s263 + $0x5c] sm:$0xf] %v979
          %1044 = vst [vmem:[%s263 + $0x60] sm:$0xf] %v980
          %1045 = vst [vmem:[%s263 + $0x64] sm:$0xf] %v981
          %1046 = vst [vmem:[%s263 + $0x68] sm:$0xf] %v982
          %1047 = vst [vmem:[%s263 + $0x6c] sm:$0xf] %v983
          %1048 = vst [vmem:[%s263 + $0x70] sm:$0xf] %v984
          %1049 = vst [vmem:[%s263 + $0x74] sm:$0xf] %v985
          %1050 = vst [vmem:[%s263 + $0x78] sm:$0xf] %v986
          %1051 = vst [vmem:[%s263 + $0x7c] sm:$0xf] %v987
        $region44: #{tpu_custom_call.1} parent=35 // pred_fallthru
          _
        %s1052 = sand.u32 %s155, 1
        %s1053 = scalar_lea.sflag [#allocation4], %s1052
        %s1054 = sand.u32 %s155, 1
        %s1055 = smul.addr %s1054, 128
        %s1056 = scalar_lea.vmem [#allocation3], %s1055
        // Predicated region
        $region45: #{tpu_custom_call.1} parent=35 // pred_check
          %p1057 = pneg %p165
        $region46: #{tpu_custom_call.1} parent=35 // pred_check_branch
          %1059 = sbr.rel (%p1057) target = $region48
        $region47: #{tpu_custom_call.1} parent=35 // pred_region
          %s1060 = smul.u32 32, %s23
          %s1062 = ssub.s32 2048, 2048
          %1063 = vsyncadd %s1053, %s1062
          %s1064 = sadd.s32 %s24, %s1060
          %s1065 = smul.addr %s1064, 64
          %s1066 = scalar_lea.hbm %s4, %s1065
          %s1067 = sshll.u32 %s1056, 4
          %s1068 = int_to_ptr.vmem [resolvable:$true] %s1067
          %1073 = dma.vmem_to_hbm [thread:$0]  %s1068, 2048, %s1066, %s1053, 64, 64, 4
        $region48: #{tpu_custom_call.1} parent=35 // pred_fallthru
          _
      $region36: #{tpu_custom_call.1} parent=5 // pred_fallthru
        _
      %p1074 = scmp.le.s32.totalorder 2, %s13
      // Predicated region
      $region49: #{tpu_custom_call.1} parent=5 // pred_check
        %p1075 = pneg %p1074
      $region50: #{tpu_custom_call.1} parent=5 // pred_check_branch
        %1077 = sbr.rel (%p1075) target = $region52
      $region51: #{tpu_custom_call.1} parent=5 // pred_region
        %s1078 = ssub.s32 %s13, 2
        // Predicated region
        $region53: #{tpu_custom_call.1} parent=51 // pred_check
          %p1079 = pneg %p171
        $region54: #{tpu_custom_call.1} parent=51 // pred_check_branch
          %1081 = sbr.rel (%p1079) target = $region56
        $region55: #{tpu_custom_call.1} parent=51 // pred_region
          %s1082 = sand.u32 %s156, 1
          %s1083 = scalar_lea.sflag [#allocation4], %s1082
          %s1084 = sand.u32 %s156, 1
          %s1085 = smul.addr %s1084, 128
          %s1086 = scalar_lea.vmem [#allocation3], %s1085
          %1087 = dma.done %s1083, 2048
        $region56: #{tpu_custom_call.1} parent=51 // pred_fallthru
          _
      $region52: #{tpu_custom_call.1} parent=5 // pred_fallthru
        _
    $region6: #{tpu_custom_call.1} parent=1 // loop_footer
      %s17 = sadd.s32 1, %s13
    $region7: #{tpu_custom_call.1} parent=1 // loop_footer_branch
      %12 = sbr.rel target = $region3
    $region8: #{tpu_custom_call.1} parent=1 // loop_exit
      _
    %1088 = vsyncpa [#allocation4], 1
    %s1089 = scalar_lea.sflag [#allocation4], 1
    %1090 = vsyncpa %s1089, 1

</llo_original>
